<compile_context>
chip_gen: v6e
topology: v6e:2x2x1
jax: 0.10.0
libtpu: 0.0.40
codegen_flags: <defaults>
</compile_context>

<pallas_src>
import jax
import jax.numpy as jnp
from jax.experimental import pallas as pl
from jax.experimental.pallas import tpu as pltpu

# ----------------------------- model configuration -----------------------------
FIELD_DIMS = [5, 6, 7, 8]          # field vocabulary sizes
F = len(FIELD_DIMS)                # num_fields = 4
E = 16                             # embed_dim
CROSS = [8, 8]                     # cross_layer_sizes
SPLIT_HALF = True
MLP_DIMS = [32, 16]                # mlp_dims (2 layers)
M1, M2 = MLP_DIMS
B = 16                             # batch size
TB = B                             # whole batch in one grid step
EPS = 1e-5                         # BatchNorm eps (torch default)


def _fc_input_dim():
    total = 0
    for i, c in enumerate(CROSS):
        keep = c // 2 if (SPLIT_HALF and i != len(CROSS) - 1) else c
        total += keep
    return total


FC_DIM = _fc_input_dim()           # = 12 for CROSS=[8,8], split_half=True


def _round8(n):
    return -(-n // 8) * 8


def _build_cin_layout():
    """Sublane-aligned packing layout shared by wrapper packing and kernel."""
    layers = []
    wrow = 0        # sublane offset inside cin_w_pk (always a multiple of 8)
    bcol = 2        # lane column inside `small` (cols 0/1 hold the MLP biases)
    fcoff = 0       # row offset inside fc_w
    prev_h = F
    for i, c in enumerate(CROSS):
        last = (i == len(CROSS) - 1)
        fh = F * prev_h
        if SPLIT_HALF and not last:
            ck = c // 2
            ch = c - ck
        else:
            ck, ch = c, 0
        lay = dict(H=prev_h, fh=fh, ck=ck, ch=ch,
                   w_keep_off=wrow, b_keep_col=bcol,
                   w_hid_off=None, b_hid_col=None, fc_off=fcoff)
        wrow += _round8(ck)
        bcol += 1
        if ch:
            lay['w_hid_off'] = wrow
            lay['b_hid_col'] = bcol
            wrow += _round8(ch)
            bcol += 1
        layers.append(lay)
        fcoff += ck
        prev_h = ch if ch else c
    w_cols = max(l['fh'] for l in layers)
    return layers, wrow, w_cols, bcol


CIN_LAYERS, CIN_W_ROWS, CIN_W_COLS, _N_SMALL_COLS_USED = _build_cin_layout()

# ------- packed "small operands" array layout (shared wrapper <-> kernel) -------
ROWV_BASE = _round8(max([M1, M2] + [l['ck'] for l in CIN_LAYERS]
                        + [l['ch'] for l in CIN_LAYERS]))
ROW_LIN = ROWV_BASE          # row: per-sample linear term (+ folded scalar biases)
ROW_OUTW = ROWV_BASE + 1     # row: output-layer weight row (1, M2)
ROW_FC_BASE = ROWV_BASE + 2  # rows: per-layer fc (CIN head) keep weights
SMALL_ROWS = _round8(ROW_FC_BASE + len(CROSS))
SMALL_COLS = 128
assert SMALL_COLS >= max(_N_SMALL_COLS_USED, TB, M2,
                         max(l['ck'] for l in CIN_LAYERS))


# ---------------------------------- kernel -------------------------------------
def _xdeepfm_kernel(embc_ref, embf_ref, cinw_ref, mw1_ref, mw2_ref,
                    sel_ref, small_ref, out_ref):
    """All arrays are channel/field-major with the batch (or batch*E) on lanes.

    embc_ref  : (F, B*E)                  embeddings, field-major (CIN path)
    embf_ref  : (F*E, B)                  embeddings, flattened-feature-major (MLP)
    cinw_ref  : (CIN_W_ROWS, CIN_W_COLS)  8-aligned keep/hidden CIN weight blocks
    mw1_ref   : (M1, F*E)                 MLP layer-1 weight, BN folded, channel-major
    mw2_ref   : (M2, M1)                  MLP layer-2 weight, BN folded, channel-major
    sel_ref   : (B*E, B)                  constant 0/1 E-pooling selection matrix
    small_ref : (SMALL_ROWS, 128)         packed tiny operands (see layout constants)
    out_ref   : (1, B)                    sigmoid outputs
    """
    TBE = TB * E
    x0 = embc_ref[...]                                    # (F, TBE)

    # x0 replication hoisted out of the layer loop (cached per distinct H).
    x0_rep_cache = {}

    def x0_rep(H):
        if H not in x0_rep_cache:
            x0_rep_cache[H] = jnp.concatenate(
                [jnp.broadcast_to(x0[f:f + 1, :], (H, TBE)) for f in range(F)],
                axis=0)                                   # (F*H, TBE)
        return x0_rep_cache[H]

    # ------------- CIN with the fc head fused into the E-pooling -------------
    h = x0
    cin_vec = jnp.zeros((1, TBE), jnp.float32)
    for i, lay in enumerate(CIN_LAYERS):
        H, fh, ck, ch = lay['H'], lay['fh'], lay['ck'], lay['ch']
        # z[f*H + hh, :] = x0[f, :] * h[hh, :]  (one sublane concat + one VPU mul)
        z = x0_rep(H) * jnp.concatenate([h] * F, axis=0)  # (F*H, TBE)

        ko = lay['w_keep_off']
        wk = cinw_ref[ko:ko + ck, 0:fh]                   # 8-aligned sublane slice
        bk = small_ref[0:ck, lay['b_keep_col']:lay['b_keep_col'] + 1]
        tk = jnp.maximum(
            jnp.dot(wk, z, preferred_element_type=jnp.float32) + bk, 0.0)
        fc_i = small_ref[ROW_FC_BASE + i:ROW_FC_BASE + i + 1, 0:ck]   # (1, ck)
        cin_vec = cin_vec + jnp.dot(fc_i, tk, preferred_element_type=jnp.float32)

        if ch:
            ho = lay['w_hid_off']
            wh = cinw_ref[ho:ho + ch, 0:fh]
            bh = small_ref[0:ch, lay['b_hid_col']:lay['b_hid_col'] + 1]
            h = jnp.maximum(
                jnp.dot(wh, z, preferred_element_type=jnp.float32) + bh, 0.0)

    # pool over E: one (1, B*E) @ (B*E, B) dot against the constant 0/1 matrix
    cin_pool = jnp.dot(cin_vec, sel_ref[...],
                       preferred_element_type=jnp.float32)            # (1, B)

    # ------------- MLP (channel-major, BN folded, dropout p=0) ---------------
    b1 = small_ref[0:M1, 0:1]
    b2 = small_ref[0:M2, 1:2]
    h1 = jnp.maximum(
        jnp.dot(mw1_ref[...], embf_ref[...],
                preferred_element_type=jnp.float32) + b1, 0.0)         # (M1, B)
    h2 = jnp.maximum(
        jnp.dot(mw2_ref[...], h1, preferred_element_type=jnp.float32) + b2,
        0.0)                                                           # (M2, B)

    # ------------- head + sigmoid ---------------------------------------------
    outw = small_ref[ROW_OUTW:ROW_OUTW + 1, 0:M2]                      # (1, M2)
    lin = small_ref[ROW_LIN:ROW_LIN + 1, 0:TB]                         # (1, B)
    logits = (lin + cin_pool
              + jnp.dot(outw, h2, preferred_element_type=jnp.float32))
    out_ref[...] = jax.nn.sigmoid(logits)


# --------------------------------- wrapper -------------------------------------
def _field_offsets():
    offs = [0]
    for d in FIELD_DIMS[:-1]:
        offs.append(offs[-1] + d)
    return jnp.asarray(offs, dtype=jnp.int32)


def xdeepfm_pallas(x_idx, p):
    """x_idx: (B, F) int32 field indices. Returns (B,) float32 sigmoid outputs."""
    bsz = x_idx.shape[0]
    offsets = _field_offsets()
    idx = x_idx + offsets[None, :]                               # (B, F) global indices

    # glue: embedding / linear-term gathers in plain JAX
    emb = p['embed_table'][idx]                                  # (B, F, E)
    # fold ALL scalar biases (linear bias, CIN fc bias, output bias) into lin
    lin = (jnp.sum(p['linear_table'][idx], axis=1)
           + p['linear_bias'] + p['fc_b'] + p['out_b'])          # (B, 1)

    # embedding layouts (wrapper-side layout plumbing)
    emb_cin = jnp.transpose(emb, (1, 0, 2)).reshape(F, bsz * E)  # (F, B*E)
    emb_flat_t = emb.reshape(bsz, F * E).T                       # (F*E, B)

    # tile-aligned CIN weight packing: keep/hidden blocks stacked along sublanes
    cin_w_pk = jnp.zeros((CIN_W_ROWS, CIN_W_COLS), jnp.float32)
    for i, lay in enumerate(CIN_LAYERS):
        w = p[f'cin_w{i}']                                       # (c, F*H_i)
        ck, ch, fh = lay['ck'], lay['ch'], lay['fh']
        cin_w_pk = cin_w_pk.at[lay['w_keep_off']:lay['w_keep_off'] + ck,
                               0:fh].set(w[0:ck])
        if ch:
            cin_w_pk = cin_w_pk.at[lay['w_hid_off']:lay['w_hid_off'] + ch,
                                   0:fh].set(w[ck:ck + ch])

    # fold eval-mode BatchNorm into the MLP linear layers; channel-major
    s1 = p['bn1_g'] * jax.lax.rsqrt(p['bn1_rv'] + EPS)           # (1, M1)
    mw1t = (p['mlp_w1'] * s1).T                                  # (M1, F*E)
    mb1 = (p['mlp_b1'] - p['bn1_rm']) * s1 + p['bn1_b']          # (1, M1)
    s2 = p['bn2_g'] * jax.lax.rsqrt(p['bn2_rv'] + EPS)           # (1, M2)
    mw2t = (p['mlp_w2'] * s2).T                                  # (M2, M1)
    mb2 = (p['mlp_b2'] - p['bn2_rm']) * s2 + p['bn2_b']          # (1, M2)

    # constant E-pooling selection matrix, built once in the wrapper
    lane = jax.lax.broadcasted_iota(jnp.int32, (bsz * E, bsz), 0)
    col = jax.lax.broadcasted_iota(jnp.int32, (bsz * E, bsz), 1)
    sel = (lane // E == col).astype(jnp.float32)                 # (B*E, B)

    # one packed array for every tiny operand (cuts DMA descriptor count)
    small = jnp.zeros((SMALL_ROWS, SMALL_COLS), jnp.float32)
    small = small.at[0:M1, 0].set(mb1[0])                        # MLP bias 1
    small = small.at[0:M2, 1].set(mb2[0])                        # MLP bias 2
    for i, lay in enumerate(CIN_LAYERS):
        b = p[f'cin_b{i}']                                       # (c, 1)
        ck, ch = lay['ck'], lay['ch']
        small = small.at[0:ck, lay['b_keep_col']].set(b[0:ck, 0])
        if ch:
            small = small.at[0:ch, lay['b_hid_col']].set(b[ck:ck + ch, 0])
        small = small.at[ROW_FC_BASE + i, 0:ck].set(
            p['fc_w'][lay['fc_off']:lay['fc_off'] + ck, 0])
    small = small.at[ROW_LIN, 0:bsz].set(lin[:, 0])
    small = small.at[ROW_OUTW, 0:M2].set(p['out_w'][:, 0])

    inputs = [emb_cin, emb_flat_t, cin_w_pk, mw1t, mw2t, sel, small]

    grid_spec = pltpu.PrefetchScalarGridSpec(
        num_scalar_prefetch=0,
        grid=(bsz // TB,),                                       # = (1,) here
        in_specs=[pl.BlockSpec(a.shape, lambda i: (0, 0)) for a in inputs],
        out_specs=pl.BlockSpec((1, TB), lambda i: (0, i)),
    )

    out = pl.pallas_call(
        _xdeepfm_kernel,
        out_shape=jax.ShapeDtypeStruct((1, bsz), jnp.float32),
        grid_spec=grid_spec,
        compiler_params=pltpu.CompilerParams(
            dimension_semantics=("parallel",)),
    )(*inputs)
    return out[0, :]


# --------------------------- pure-JAX reference ---------------------------------
def reference_forward(x_idx, p):
    offsets = _field_offsets()
    idx = x_idx + offsets[None, :]
    emb = p['embed_table'][idx]
    lin = jnp.sum(p['linear_table'][idx], axis=1) + p['linear_bias']

    # CIN
    x0, h = emb, emb
    feats = []
    n = len(CROSS)
    for i in range(n):
        H = h.shape[1]
        z = (x0[:, :, None, :] * h[:, None, :, :]).reshape(emb.shape[0], F * H, E)
        t = jax.nn.relu(jnp.einsum('ck,bke->bce', p[f'cin_w{i}'], z)
                        + p[f'cin_b{i}'][None, :, :])
        if SPLIT_HALF and i != n - 1:
            half = CROSS[i] // 2
            keep, h = t[:, :half], t[:, half:]
        else:
            keep, h = t, t
        feats.append(jnp.sum(keep, axis=2))
    pooled = jnp.concatenate(feats, axis=1)
    cin = pooled @ p['fc_w'] + p['fc_b']

    # MLP (eval-mode BN)
    flat = emb.reshape(emb.shape[0], F * E)
    h1 = flat @ p['mlp_w1'] + p['mlp_b1']
    h1 = (h1 - p['bn1_rm']) * jax.lax.rsqrt(p['bn1_rv'] + EPS) * p['bn1_g'] + p['bn1_b']
    h1 = jax.nn.relu(h1)
    h2 = h1 @ p['mlp_w2'] + p['mlp_b2']
    h2 = (h2 - p['bn2_rm']) * jax.lax.rsqrt(p['bn2_rv'] + EPS) * p['bn2_g'] + p['bn2_b']
    h2 = jax.nn.relu(h2)
    mlp = h2 @ p['out_w'] + p['out_b']

    return jax.nn.sigmoid(lin + cin + mlp)[:, 0]


# ------------------------------ param init --------------------------------------
def init_params(key):
    n_items = sum(FIELD_DIMS)
    ks = iter(jax.random.split(key, 32))

    def rnd(shape, scale=0.1):
        return jax.random.normal(next(ks), shape, dtype=jnp.float32) * scale

    p = {}
    p['embed_table'] = rnd((n_items, E))
    p['linear_table'] = rnd((n_items, 1))
    p['linear_bias'] = jnp.zeros((1, 1), jnp.float32)

    prev = F
    for i, c in enumerate(CROSS):
        p[f'cin_w{i}'] = rnd((c, F * prev))      # Conv1d(out=c, in=F*prev, k=1) weight
        p[f'cin_b{i}'] = rnd((c, 1))
        prev = c // 2 if (SPLIT_HALF and i != len(CROSS) - 1) else c
    p['fc_w'] = rnd((FC_DIM, 1))
    p['fc_b'] = rnd((1, 1))

    dims = [F * E] + list(MLP_DIMS)
    for li in range(len(MLP_DIMS)):
        d = dims[li + 1]
        p[f'mlp_w{li + 1}'] = rnd((dims[li], d))
        p[f'mlp_b{li + 1}'] = rnd((1, d))
        p[f'bn{li + 1}_g'] = 1.0 + rnd((1, d))
        p[f'bn{li + 1}_b'] = rnd((1, d))
        p[f'bn{li + 1}_rm'] = rnd((1, d))
        p[f'bn{li + 1}_rv'] = 1.0 + jnp.abs(rnd((1, d)))
    p['out_w'] = rnd((MLP_DIMS[-1], 1))
    p['out_b'] = rnd((1, 1))
    return p


# ---------------------------------- main -----------------------------------------
if __name__ == "__main__":
    master = jax.random.PRNGKey(0)
    pkey, xkey = jax.random.split(master)

    params = init_params(pkey)

    xks = jax.random.split(xkey, F)
    cols = [jax.random.randint(xks[f], (B,), 0, FIELD_DIMS[f]) for f in range(F)]
    x = jnp.stack(cols, axis=1).astype(jnp.int32)        # (B, F) field indices

    run = jax.jit(xdeepfm_pallas)
    y = jax.block_until_ready(run(x, params))            # (B,)
    y_ref = jax.block_until_ready(reference_forward(x, params))

    assert y.shape == (B,)
    assert bool(jnp.all(jnp.isfinite(y)))
    assert bool(jnp.allclose(y, y_ref, atol=1e-3, rtol=1e-3)), (y, y_ref)
    print("KERNEL_OK")
</pallas_src>

<mosaic_0001>
module attributes {stable_mosaic.version = 11 : i64} {
  func.func @_xdeepfm_kernel(%arg0: i32, %arg1: memref<4x256xf32, #tpu.memory_space<vmem>>, %arg2: memref<64x16xf32, #tpu.memory_space<vmem>>, %arg3: memref<24x16xf32, #tpu.memory_space<vmem>>, %arg4: memref<32x64xf32, #tpu.memory_space<vmem>>, %arg5: memref<16x32xf32, #tpu.memory_space<vmem>>, %arg6: memref<256x16xf32, #tpu.memory_space<vmem>>, %arg7: memref<40x128xf32, #tpu.memory_space<vmem>>, %arg8: memref<1x16xf32, #tpu.memory_space<vmem>>) attributes {dimension_semantics = [#tpu.dimension_semantics<parallel>], iteration_bounds = array<i64: 1>, scalar_prefetch = 0 : i64, scratch_operands = 0 : i64, tpu.core_type = #tpu.core_type<tc>, window_params = [{pipeline_mode = #tpu.pipeline_mode<synchronous>, transform_indices = @transform_0, window_bounds = array<i64: 4, 256>}, {pipeline_mode = #tpu.pipeline_mode<synchronous>, transform_indices = @transform_1, window_bounds = array<i64: 64, 16>}, {pipeline_mode = #tpu.pipeline_mode<synchronous>, transform_indices = @transform_2, window_bounds = array<i64: 24, 16>}, {pipeline_mode = #tpu.pipeline_mode<synchronous>, transform_indices = @transform_3, window_bounds = array<i64: 32, 64>}, {pipeline_mode = #tpu.pipeline_mode<synchronous>, transform_indices = @transform_4, window_bounds = array<i64: 16, 32>}, {pipeline_mode = #tpu.pipeline_mode<synchronous>, transform_indices = @transform_5, window_bounds = array<i64: 256, 16>}, {pipeline_mode = #tpu.pipeline_mode<synchronous>, transform_indices = @transform_6, window_bounds = array<i64: 40, 128>}, {transform_indices = @transform_7, window_bounds = array<i64: 1, 16>}]} {
    %c0 = arith.constant 0 : index
    %c0_0 = arith.constant 0 : index
    %0 = vector.load %arg1[%c0, %c0_0] : memref<4x256xf32, #tpu.memory_space<vmem>>, vector<4x256xf32>
    %cst = arith.constant 0.000000e+00 : f32
    %1 = vector.broadcast %cst : f32 to vector<1x256xf32>
    %2 = vector.extract_strided_slice %0 {offsets = [0, 0], sizes = [1, 256], strides = [1, 1]} : vector<4x256xf32> to vector<1x256xf32>
    %3 = vector.shape_cast %2 : vector<1x256xf32> to vector<1x256xf32>
    %4 = vector.broadcast %3 : vector<1x256xf32> to vector<4x256xf32>
    %5 = vector.extract_strided_slice %0 {offsets = [1, 0], sizes = [1, 256], strides = [1, 1]} : vector<4x256xf32> to vector<1x256xf32>
    %6 = vector.shape_cast %5 : vector<1x256xf32> to vector<1x256xf32>
    %7 = vector.broadcast %6 : vector<1x256xf32> to vector<4x256xf32>
    %8 = vector.extract_strided_slice %0 {offsets = [2, 0], sizes = [1, 256], strides = [1, 1]} : vector<4x256xf32> to vector<1x256xf32>
    %9 = vector.shape_cast %8 : vector<1x256xf32> to vector<1x256xf32>
    %10 = vector.broadcast %9 : vector<1x256xf32> to vector<4x256xf32>
    %11 = vector.extract_strided_slice %0 {offsets = [3, 0], sizes = [1, 256], strides = [1, 1]} : vector<4x256xf32> to vector<1x256xf32>
    %12 = vector.shape_cast %11 : vector<1x256xf32> to vector<1x256xf32>
    %13 = vector.broadcast %12 : vector<1x256xf32> to vector<4x256xf32>
    %14 = tpu.concatenate %4, %7, %10, %13 in 0 : vector<4x256xf32>, vector<4x256xf32>, vector<4x256xf32>, vector<4x256xf32> -> vector<16x256xf32>
    %15 = tpu.concatenate %0, %0, %0, %0 in 0 : vector<4x256xf32>, vector<4x256xf32>, vector<4x256xf32>, vector<4x256xf32> -> vector<16x256xf32>
    %16 = arith.mulf %14, %15 : vector<16x256xf32>
    %c0_1 = arith.constant 0 : index
    %c0_2 = arith.constant 0 : index
    %17 = vector.load %arg3[%c0_1, %c0_2] : memref<24x16xf32, #tpu.memory_space<vmem>>, vector<4x16xf32>
    %c0_3 = arith.constant 0 : index
    %c2 = arith.constant 2 : index
    %18 = vector.load %arg7[%c0_3, %c2] : memref<40x128xf32, #tpu.memory_space<vmem>>, vector<4x1xf32>
    %cst_4 = arith.constant dense<0.000000e+00> : vector<4x256xf32>
    %19 = tpu.matmul %17, %16, %cst_4 {dimension_numbers = #tpu.dot_dimension_numbers<[1], [0], [0], [1], [0, 0, 1, 1], [], []>} : vector<4x16xf32>, vector<16x256xf32>, vector<4x256xf32> -> vector<4x256xf32>
    %20 = vector.broadcast %18 : vector<4x1xf32> to vector<4x256xf32>
    %21 = arith.addf %19, %20 : vector<4x256xf32>
    %cst_5 = arith.constant 0.000000e+00 : f32
    %22 = vector.broadcast %cst_5 : f32 to vector<4x256xf32>
    %23 = arith.maximumf %21, %22 : vector<4x256xf32>
    %c34 = arith.constant 34 : index
    %c0_6 = arith.constant 0 : index
    %24 = vector.load %arg7[%c34, %c0_6] : memref<40x128xf32, #tpu.memory_space<vmem>>, vector<1x4xf32>
    %cst_7 = arith.constant dense<0.000000e+00> : vector<1x256xf32>
    %25 = tpu.matmul %24, %23, %cst_7 {dimension_numbers = #tpu.dot_dimension_numbers<[1], [0], [0], [1], [0, 0, 1, 1], [], []>} : vector<1x4xf32>, vector<4x256xf32>, vector<1x256xf32> -> vector<1x256xf32>
    %26 = arith.addf %1, %25 : vector<1x256xf32>
    %c8 = arith.constant 8 : index
    %c0_8 = arith.constant 0 : index
    %27 = vector.load %arg3[%c8, %c0_8] : memref<24x16xf32, #tpu.memory_space<vmem>>, vector<4x16xf32>
    %c0_9 = arith.constant 0 : index
    %c3 = arith.constant 3 : index
    %28 = vector.load %arg7[%c0_9, %c3] : memref<40x128xf32, #tpu.memory_space<vmem>>, vector<4x1xf32>
    %cst_10 = arith.constant dense<0.000000e+00> : vector<4x256xf32>
    %29 = tpu.matmul %27, %16, %cst_10 {dimension_numbers = #tpu.dot_dimension_numbers<[1], [0], [0], [1], [0, 0, 1, 1], [], []>} : vector<4x16xf32>, vector<16x256xf32>, vector<4x256xf32> -> vector<4x256xf32>
    %30 = vector.broadcast %28 : vector<4x1xf32> to vector<4x256xf32>
    %31 = arith.addf %29, %30 : vector<4x256xf32>
    %cst_11 = arith.constant 0.000000e+00 : f32
    %32 = vector.broadcast %cst_11 : f32 to vector<4x256xf32>
    %33 = arith.maximumf %31, %32 : vector<4x256xf32>
    %34 = tpu.concatenate %33, %33, %33, %33 in 0 : vector<4x256xf32>, vector<4x256xf32>, vector<4x256xf32>, vector<4x256xf32> -> vector<16x256xf32>
    %35 = arith.mulf %14, %34 : vector<16x256xf32>
    %c16 = arith.constant 16 : index
    %c0_12 = arith.constant 0 : index
    %36 = vector.load %arg3[%c16, %c0_12] : memref<24x16xf32, #tpu.memory_space<vmem>>, vector<8x16xf32>
    %c0_13 = arith.constant 0 : index
    %c4 = arith.constant 4 : index
    %37 = vector.load %arg7[%c0_13, %c4] : memref<40x128xf32, #tpu.memory_space<vmem>>, vector<8x1xf32>
    %cst_14 = arith.constant dense<0.000000e+00> : vector<8x256xf32>
    %38 = tpu.matmul %36, %35, %cst_14 {dimension_numbers = #tpu.dot_dimension_numbers<[1], [0], [0], [1], [0, 0, 1, 1], [], []>} : vector<8x16xf32>, vector<16x256xf32>, vector<8x256xf32> -> vector<8x256xf32>
    %39 = vector.broadcast %37 : vector<8x1xf32> to vector<8x256xf32>
    %40 = arith.addf %38, %39 : vector<8x256xf32>
    %cst_15 = arith.constant 0.000000e+00 : f32
    %41 = vector.broadcast %cst_15 : f32 to vector<8x256xf32>
    %42 = arith.maximumf %40, %41 : vector<8x256xf32>
    %c35 = arith.constant 35 : index
    %c0_16 = arith.constant 0 : index
    %43 = vector.load %arg7[%c35, %c0_16] : memref<40x128xf32, #tpu.memory_space<vmem>>, vector<1x8xf32>
    %cst_17 = arith.constant dense<0.000000e+00> : vector<1x256xf32>
    %44 = tpu.matmul %43, %42, %cst_17 {dimension_numbers = #tpu.dot_dimension_numbers<[1], [0], [0], [1], [0, 0, 1, 1], [], []>} : vector<1x8xf32>, vector<8x256xf32>, vector<1x256xf32> -> vector<1x256xf32>
    %45 = arith.addf %26, %44 : vector<1x256xf32>
    %c0_18 = arith.constant 0 : index
    %c0_19 = arith.constant 0 : index
    %46 = vector.load %arg6[%c0_18, %c0_19] : memref<256x16xf32, #tpu.memory_space<vmem>>, vector<256x16xf32>
    %cst_20 = arith.constant dense<0.000000e+00> : vector<1x16xf32>
    %47 = tpu.matmul %45, %46, %cst_20 {dimension_numbers = #tpu.dot_dimension_numbers<[1], [0], [0], [1], [0, 0, 1, 1], [], []>} : vector<1x256xf32>, vector<256x16xf32>, vector<1x16xf32> -> vector<1x16xf32>
    %c0_21 = arith.constant 0 : index
    %c0_22 = arith.constant 0 : index
    %48 = vector.load %arg7[%c0_21, %c0_22] : memref<40x128xf32, #tpu.memory_space<vmem>>, vector<32x1xf32>
    %c0_23 = arith.constant 0 : index
    %c1 = arith.constant 1 : index
    %49 = vector.load %arg7[%c0_23, %c1] : memref<40x128xf32, #tpu.memory_space<vmem>>, vector<16x1xf32>
    %c0_24 = arith.constant 0 : index
    %c0_25 = arith.constant 0 : index
    %50 = vector.load %arg4[%c0_24, %c0_25] : memref<32x64xf32, #tpu.memory_space<vmem>>, vector<32x64xf32>
    %c0_26 = arith.constant 0 : index
    %c0_27 = arith.constant 0 : index
    %51 = vector.load %arg2[%c0_26, %c0_27] : memref<64x16xf32, #tpu.memory_space<vmem>>, vector<64x16xf32>
    %cst_28 = arith.constant dense<0.000000e+00> : vector<32x16xf32>
    %52 = tpu.matmul %50, %51, %cst_28 {dimension_numbers = #tpu.dot_dimension_numbers<[1], [0], [0], [1], [0, 0, 1, 1], [], []>} : vector<32x64xf32>, vector<64x16xf32>, vector<32x16xf32> -> vector<32x16xf32>
    %53 = vector.broadcast %48 : vector<32x1xf32> to vector<32x16xf32>
    %54 = arith.addf %52, %53 : vector<32x16xf32>
    %cst_29 = arith.constant 0.000000e+00 : f32
    %55 = vector.broadcast %cst_29 : f32 to vector<32x16xf32>
    %56 = arith.maximumf %54, %55 : vector<32x16xf32>
    %c0_30 = arith.constant 0 : index
    %c0_31 = arith.constant 0 : index
    %57 = vector.load %arg5[%c0_30, %c0_31] : memref<16x32xf32, #tpu.memory_space<vmem>>, vector<16x32xf32>
    %cst_32 = arith.constant dense<0.000000e+00> : vector<16x16xf32>
    %58 = tpu.matmul %57, %56, %cst_32 {dimension_numbers = #tpu.dot_dimension_numbers<[1], [0], [0], [1], [0, 0, 1, 1], [], []>} : vector<16x32xf32>, vector<32x16xf32>, vector<16x16xf32> -> vector<16x16xf32>
    %59 = vector.broadcast %49 : vector<16x1xf32> to vector<16x16xf32>
    %60 = arith.addf %58, %59 : vector<16x16xf32>
    %cst_33 = arith.constant 0.000000e+00 : f32
    %61 = vector.broadcast %cst_33 : f32 to vector<16x16xf32>
    %62 = arith.maximumf %60, %61 : vector<16x16xf32>
    %c33 = arith.constant 33 : index
    %c0_34 = arith.constant 0 : index
    %63 = vector.load %arg7[%c33, %c0_34] : memref<40x128xf32, #tpu.memory_space<vmem>>, vector<1x16xf32>
    %c32 = arith.constant 32 : index
    %c0_35 = arith.constant 0 : index
    %64 = vector.load %arg7[%c32, %c0_35] : memref<40x128xf32, #tpu.memory_space<vmem>>, vector<1x16xf32>
    %65 = arith.addf %64, %47 : vector<1x16xf32>
    %cst_36 = arith.constant dense<0.000000e+00> : vector<1x16xf32>
    %66 = tpu.matmul %63, %62, %cst_36 {dimension_numbers = #tpu.dot_dimension_numbers<[1], [0], [0], [1], [0, 0, 1, 1], [], []>} : vector<1x16xf32>, vector<16x16xf32>, vector<1x16xf32> -> vector<1x16xf32>
    %67 = arith.addf %65, %66 : vector<1x16xf32>
    %68 = arith.negf %67 : vector<1x16xf32>
    %69 = math.exp %68 : vector<1x16xf32>
    %cst_37 = arith.constant 1.000000e+00 : f32
    %70 = vector.broadcast %cst_37 : f32 to vector<1x16xf32>
    %71 = arith.addf %70, %69 : vector<1x16xf32>
    %72 = arith.divf %70, %71 : vector<1x16xf32>
    %c0_38 = arith.constant 0 : index
    %c0_39 = arith.constant 0 : index
    %73 = vector.load %arg8[%c0_38, %c0_39] : memref<1x16xf32, #tpu.memory_space<vmem>>, vector<1x16xf32>
    tpu.vector_store %arg8[%c0_38, %c0_39], %72 {strides = array<i32>} : memref<1x16xf32, #tpu.memory_space<vmem>>, vector<1x16xf32>,
    return
  }
  func.func @transform_0(%arg0: i32) -> (i32, i32) {
    %c0_i32 = arith.constant 0 : i32
    %c0_i32_0 = arith.constant 0 : i32
    %c0_i32_1 = arith.constant 0 : i32
    return %c0_i32, %c0_i32_0 : i32, i32
  }
  func.func @transform_1(%arg0: i32) -> (i32, i32) {
    %c0_i32 = arith.constant 0 : i32
    %c0_i32_0 = arith.constant 0 : i32
    %c0_i32_1 = arith.constant 0 : i32
    return %c0_i32, %c0_i32_0 : i32, i32
  }
  func.func @transform_2(%arg0: i32) -> (i32, i32) {
    %c0_i32 = arith.constant 0 : i32
    %c0_i32_0 = arith.constant 0 : i32
    %c0_i32_1 = arith.constant 0 : i32
    return %c0_i32, %c0_i32_0 : i32, i32
  }
  func.func @transform_3(%arg0: i32) -> (i32, i32) {
    %c0_i32 = arith.constant 0 : i32
    %c0_i32_0 = arith.constant 0 : i32
    %c0_i32_1 = arith.constant 0 : i32
    return %c0_i32, %c0_i32_0 : i32, i32
  }
  func.func @transform_4(%arg0: i32) -> (i32, i32) {
    %c0_i32 = arith.constant 0 : i32
    %c0_i32_0 = arith.constant 0 : i32
    %c0_i32_1 = arith.constant 0 : i32
    return %c0_i32, %c0_i32_0 : i32, i32
  }
  func.func @transform_5(%arg0: i32) -> (i32, i32) {
    %c0_i32 = arith.constant 0 : i32
    %c0_i32_0 = arith.constant 0 : i32
    %c0_i32_1 = arith.constant 0 : i32
    return %c0_i32, %c0_i32_0 : i32, i32
  }
  func.func @transform_6(%arg0: i32) -> (i32, i32) {
    %c0_i32 = arith.constant 0 : i32
    %c0_i32_0 = arith.constant 0 : i32
    %c0_i32_1 = arith.constant 0 : i32
    return %c0_i32, %c0_i32_0 : i32, i32
  }
  func.func @transform_7(%arg0: i32) -> (i32, i32) {
    %c0_i32 = arith.constant 0 : i32
    %c0_i32_0 = arith.constant 0 : i32
    return %c0_i32, %arg0 : i32, i32
  }
}

</mosaic_0001>

<llo_original>
// kernel: xdeepfm_pallas.1
$region0: #{xdeepfm_pallas.1}
  #allocation0 [shape = 'u32[]', space=smem, size = 0x4, offset = 0x4, fixed_abs, tag = 'smem constant byte address 0x4 - core index']
  #allocation1 [shape = 'u32[144,128]{1,0:T(1,128)}', space=vmem, size = 0x12000, scoped, tag = 'internal scratch']
  %s0 = inlined_call_operand.vmem [shape: f32[4,256], index: 0, kind: input, shape index: {}]
  %s1 = inlined_call_operand.vmem [shape: f32[64,16], index: 1, kind: input, shape index: {}]
  %s2 = inlined_call_operand.vmem [shape: f32[24,16], index: 2, kind: input, shape index: {}]
  %s3 = inlined_call_operand.vmem [shape: f32[32,64], index: 3, kind: input, shape index: {}]
  %s4 = inlined_call_operand.vmem [shape: f32[16,32], index: 4, kind: input, shape index: {}]
  %s5 = inlined_call_operand.vmem [shape: f32[256,16], index: 5, kind: input, shape index: {}]
  %s6 = inlined_call_operand.vmem [shape: f32[40,128], index: 6, kind: input, shape index: {}]
  %s7 = inlined_call_operand.hbm [shape: f32[1,16], index: 7, kind: output, shape index: {}]
  %s8 = sld [smem:[#allocation0]]
  $region38: #{xdeepfm_pallas.1} parent=0
    _
  %s10 = ssub.s32 1, %s8
  %s11 = scalar_select 0, %s10, %s8
  $region1: #{xdeepfm_pallas.1} parent=0
    #allocation2 [shape = 'u8[512]{0}', space=vmem, size = 0x400, scoped, tag = 'output window, operand 0, single buffered']
    #allocation3 [shape = 's32[1]{0}', space=sflag, size = 0x4, scoped, tag = 'scoped memory for xdeepfm_pallas.1']
    %12 = vsyncpa [#allocation3], 0
    // Predicated region
    $region2: #{xdeepfm_pallas.1} parent=1 // pred_check
      _
    $region3: #{xdeepfm_pallas.1} parent=1 // pred_check_branch
      %14 = sbr.rel (0) target = $region5
    $region4: #{xdeepfm_pallas.1} parent=1 // pred_region
      _
    $region5: #{xdeepfm_pallas.1} parent=1 // pred_fallthru
      _
    // Predicated region
    $region6: #{xdeepfm_pallas.1} parent=1 // pred_check
      _
    $region7: #{xdeepfm_pallas.1} parent=1 // pred_check_branch
      %16 = sbr.rel (0) target = $region9
    $region8: #{xdeepfm_pallas.1} parent=1 // pred_region
      _
    $region9: #{xdeepfm_pallas.1} parent=1 // pred_fallthru
      _
    // Predicated region
    $region10: #{xdeepfm_pallas.1} parent=1 // pred_check
      _
    $region11: #{xdeepfm_pallas.1} parent=1 // pred_check_branch
      %18 = sbr.rel (0) target = $region13
    $region12: #{xdeepfm_pallas.1} parent=1 // pred_region
      _
    $region13: #{xdeepfm_pallas.1} parent=1 // pred_fallthru
      _
    // Predicated region
    $region14: #{xdeepfm_pallas.1} parent=1 // pred_check
      _
    $region15: #{xdeepfm_pallas.1} parent=1 // pred_check_branch
      %20 = sbr.rel (0) target = $region17
    $region16: #{xdeepfm_pallas.1} parent=1 // pred_region
      _
    $region17: #{xdeepfm_pallas.1} parent=1 // pred_fallthru
      _
    // Predicated region
    $region18: #{xdeepfm_pallas.1} parent=1 // pred_check
      _
    $region19: #{xdeepfm_pallas.1} parent=1 // pred_check_branch
      %22 = sbr.rel (0) target = $region21
    $region20: #{xdeepfm_pallas.1} parent=1 // pred_region
      _
    $region21: #{xdeepfm_pallas.1} parent=1 // pred_fallthru
      _
    // Predicated region
    $region22: #{xdeepfm_pallas.1} parent=1 // pred_check
      _
    $region23: #{xdeepfm_pallas.1} parent=1 // pred_check_branch
      %24 = sbr.rel (0) target = $region25
    $region24: #{xdeepfm_pallas.1} parent=1 // pred_region
      _
    $region25: #{xdeepfm_pallas.1} parent=1 // pred_fallthru
      _
    // Predicated region
    $region26: #{xdeepfm_pallas.1} parent=1 // pred_check
      _
    $region27: #{xdeepfm_pallas.1} parent=1 // pred_check_branch
      %26 = sbr.rel (0) target = $region29
    $region28: #{xdeepfm_pallas.1} parent=1 // pred_region
      _
    $region29: #{xdeepfm_pallas.1} parent=1 // pred_fallthru
      _
    %v27 = vld [vmem:[%s0] sm:$0xff]
    %v29 = vlaneseq
    %v30 = vshrl.u32 %v29, 7
    %v31 = vsub.s32 0, %v30
    %v32 = vrot.slane %v27, %v31
    %v33 = vlaneseq
    %v34 = vshrl.u32 %v33, 7
    %v35 = vsub.s32 4, %v34
    %v36 = vrot.slane %v27, %v35
    %v39 = vlaneseq
    %v40 = vshrl.u32 %v39, 7
    %v41 = vsub.s32 0, %v40
    %v42 = vrot.slane %v32, %v41
    %v43 = vlaneseq
    %v44 = vshrl.u32 %v43, 7
    %v45 = vsub.s32 0, %v44
    %v46 = vrot.slane %v36, %v45
    %v47 = vlaneseq
    %v48 = vshrl.u32 %v47, 7
    %v49 = vsub.s32 1, %v48
    %v50 = vrot.slane %v27, %v49
    %v51 = vlaneseq
    %v52 = vshrl.u32 %v51, 7
    %v53 = vsub.s32 5, %v52
    %v54 = vrot.slane %v27, %v53
    %v57 = vlaneseq
    %v58 = vshrl.u32 %v57, 7
    %v59 = vsub.s32 1, %v58
    %v60 = vrot.slane %v50, %v59
    %v61 = vlaneseq
    %v62 = vshrl.u32 %v61, 7
    %v63 = vsub.s32 1, %v62
    %v64 = vrot.slane %v54, %v63
    %v65 = vlaneseq
    %v66 = vshrl.u32 %v65, 7
    %v67 = vsub.s32 2, %v66
    %v68 = vrot.slane %v27, %v67
    %v69 = vlaneseq
    %v70 = vshrl.u32 %v69, 7
    %v71 = vsub.s32 6, %v70
    %v72 = vrot.slane %v27, %v71
    %v75 = vlaneseq
    %v76 = vshrl.u32 %v75, 7
    %v77 = vsub.s32 2, %v76
    %v78 = vrot.slane %v68, %v77
    %v79 = vlaneseq
    %v80 = vshrl.u32 %v79, 7
    %v81 = vsub.s32 2, %v80
    %v82 = vrot.slane %v72, %v81
    %v83 = vlaneseq
    %v84 = vshrl.u32 %v83, 7
    %v85 = vsub.s32 3, %v84
    %v86 = vrot.slane %v27, %v85
    %v87 = vlaneseq
    %v88 = vshrl.u32 %v87, 7
    %v89 = vsub.s32 7, %v88
    %v90 = vrot.slane %v27, %v89
    %v93 = vlaneseq
    %v94 = vshrl.u32 %v93, 7
    %v95 = vsub.s32 3, %v94
    %v96 = vrot.slane %v86, %v95
    %v97 = vlaneseq
    %v98 = vshrl.u32 %v97, 7
    %v99 = vsub.s32 3, %v98
    %v100 = vrot.slane %v90, %v99
    %vm101 = vcmask 1043456
    %v102 = vsel %vm101, %v42, %v60
    %v103 = vsel %vm101, %v46, %v64
    %v104 = vsel %vm101, %v78, %v96
    %v105 = vsel %vm101, %v82, %v100
    %v106 = vcombine.high %v27, %v27
    %v108 = vcombine.low %v27, %v27
    %v110 = vsel %vm101, %v27, %v108
    %v111 = vsel %vm101, %v106, %v27
    %v112 = vmul.f32 %v102, %v110
    %v113 = vmul.f32 %v103, %v111
    %v114 = vmul.f32 %v104, %v110
    %v115 = vmul.f32 %v105, %v111
    %v116 = vld [vmem:[%s2] sm:$0xf]
    %v117 = vld [vmem:[%s6] sm:$0xf]
    %119 = vset.pattern.permute.xlu0 2
    %120 = vperm.xlu0 %119, %v117
    %v121 = vpop.permute.xlu0 %120
    %vm123 = vcmask 130048
    %v125 = vsel %vm123, %v116, 0
    %127 = vmatprep.subr.mxu0 0.0
    %128 = vmatpush1.msra.mxu0 0.0
    %129 = vmatprep.subr.mxu0 0.0
    %130 = vmatpush1.msra.mxu0 0.0
    %131 = vmatprep.subr.mxu0 0.0
    %132 = vmatpush1.msra.mxu0 0.0
    %133 = vmatprep.subr.mxu0 0.0
    %134 = vmatpush1.msra.mxu0 0.0
    %135 = vmatprep.subr.mxu0 0.0
    %136 = vmatpush1.msra.mxu0 0.0
    %137 = vmatprep.subr.mxu0 0.0
    %138 = vmatpush1.msra.mxu0 0.0
    %139 = vmatprep.subr.mxu0 0.0
    %140 = vmatpush1.msra.mxu0 0.0
    %141 = vmatprep.subr.mxu0 0.0
    %142 = vmatpush1.msra.mxu0 0.0
    %143 = vmatprep.subr.mxu0 0.0
    %144 = vmatpush1.msra.mxu0 0.0
    %145 = vmatprep.subr.mxu0 0.0
    %146 = vmatpush1.msra.mxu0 0.0
    %147 = vmatprep.subr.mxu0 0.0
    %148 = vmatpush1.msra.mxu0 0.0
    %149 = vmatprep.subr.mxu0 0.0
    %150 = vmatpush1.msra.mxu0 0.0
    %151 = vmatprep.subr.mxu0 0.0
    %152 = vmatpush1.msra.mxu0 0.0
    %153 = vmatprep.subr.mxu0 0.0
    %154 = vmatpush1.msra.mxu0 0.0
    %155 = vmatprep.subr.mxu0 %v115
    %156 = vmatpush1.msra.mxu0 %v114
    %157 = vmatprep.subr.mxu0 %v113
    %158 = vmatpush1.msra.mxu0 %v112
    %159 = vmatprep.subr.mxu0 0.0
    %160 = vmatpush2.msra.mxu0 0.0
    %161 = vmatprep.subr.mxu0 0.0
    %162 = vmatpush2.msra.mxu0 0.0
    %163 = vmatprep.subr.mxu0 0.0
    %164 = vmatpush2.msra.mxu0 0.0
    %165 = vmatprep.subr.mxu0 0.0
    %166 = vmatpush2.msra.mxu0 0.0
    %167 = vmatprep.subr.mxu0 0.0
    %168 = vmatpush2.msra.mxu0 0.0
    %169 = vmatprep.subr.mxu0 0.0
    %170 = vmatpush2.msra.mxu0 0.0
    %171 = vmatprep.subr.mxu0 0.0
    %172 = vmatpush2.msra.mxu0 0.0
    %173 = vmatprep.subr.mxu0 0.0
    %174 = vmatpush2.msra.mxu0 0.0
    %175 = vmatprep.subr.mxu0 0.0
    %176 = vmatpush2.msra.mxu0 0.0
    %177 = vmatprep.subr.mxu0 0.0
    %178 = vmatpush2.msra.mxu0 0.0
    %179 = vmatprep.subr.mxu0 0.0
    %180 = vmatpush2.msra.mxu0 0.0
    %181 = vmatprep.subr.mxu0 0.0
    %182 = vmatpush2.msra.mxu0 0.0
    %183 = vmatprep.subr.mxu0 0.0
    %184 = vmatpush2.msra.mxu0 0.0
    %185 = vmatprep.subr.mxu0 0.0
    %186 = vmatpush2.msra.mxu0 0.0
    %187 = vmatprep.subr.mxu0 0.0
    %188 = vmatpush2.msra.mxu0 0.0
    %189 = vmatprep.subr.mxu0 0.0
    %190 = vmatpush2.msra.mxu0 0.0
    %191 = vmatprep.mubr.f32.mxu0 0.0
    %192 = vmatmul.mubr.f32.gmra.mxu0 %v125
    %v193 = vpop.f32.mrf.mxu0
    %v194 = vadd.f32 %v121, %v193
    %v195 = vpop.f32.mrf.mxu0
    %v196 = vadd.f32 %v121, %v195
    %197 = vdwg.mxu0
    %v198 = vmax.f32 %v194, 0.0
    %v199 = vmax.f32 %v196, 0.0
    %v200 = vld [vmem:[%s6 + $0x22] sm:$0x1]
    %v201 = vld [vmem:[%s2 + $0x8] sm:$0xf]
    %202 = vset.pattern.permute.xlu0 3
    %203 = vperm.xlu0 %202, %v117
    %v204 = vpop.permute.xlu0 %203
    %v207 = vsel %vm123, %v201, 0
    %209 = vmatprep.subr.mxu0 0.0
    %210 = vmatpush1.msra.mxu0 0.0
    %211 = vmatprep.subr.mxu0 0.0
    %212 = vmatpush1.msra.mxu0 0.0
    %213 = vmatprep.subr.mxu0 0.0
    %214 = vmatpush1.msra.mxu0 0.0
    %215 = vmatprep.subr.mxu0 0.0
    %216 = vmatpush1.msra.mxu0 0.0
    %217 = vmatprep.subr.mxu0 0.0
    %218 = vmatpush1.msra.mxu0 0.0
    %219 = vmatprep.subr.mxu0 0.0
    %220 = vmatpush1.msra.mxu0 0.0
    %221 = vmatprep.subr.mxu0 0.0
    %222 = vmatpush1.msra.mxu0 0.0
    %223 = vmatprep.subr.mxu0 0.0
    %224 = vmatpush1.msra.mxu0 0.0
    %225 = vmatprep.subr.mxu0 0.0
    %226 = vmatpush1.msra.mxu0 0.0
    %227 = vmatprep.subr.mxu0 0.0
    %228 = vmatpush1.msra.mxu0 0.0
    %229 = vmatprep.subr.mxu0 0.0
    %230 = vmatpush1.msra.mxu0 0.0
    %231 = vmatprep.subr.mxu0 0.0
    %232 = vmatpush1.msra.mxu0 0.0
    %233 = vmatprep.subr.mxu0 0.0
    %234 = vmatpush1.msra.mxu0 0.0
    %235 = vmatprep.subr.mxu0 0.0
    %236 = vmatpush1.msra.mxu0 0.0
    %237 = vmatprep.subr.mxu0 %v115
    %238 = vmatpush1.msra.mxu0 %v114
    %239 = vmatprep.subr.mxu0 %v113
    %240 = vmatpush1.msra.mxu0 %v112
    %241 = vmatprep.subr.mxu0 0.0
    %242 = vmatpush2.msra.mxu0 0.0
    %243 = vmatprep.subr.mxu0 0.0
    %244 = vmatpush2.msra.mxu0 0.0
    %245 = vmatprep.subr.mxu0 0.0
    %246 = vmatpush2.msra.mxu0 0.0
    %247 = vmatprep.subr.mxu0 0.0
    %248 = vmatpush2.msra.mxu0 0.0
    %249 = vmatprep.subr.mxu0 0.0
    %250 = vmatpush2.msra.mxu0 0.0
    %251 = vmatprep.subr.mxu0 0.0
    %252 = vmatpush2.msra.mxu0 0.0
    %253 = vmatprep.subr.mxu0 0.0
    %254 = vmatpush2.msra.mxu0 0.0
    %255 = vmatprep.subr.mxu0 0.0
    %256 = vmatpush2.msra.mxu0 0.0
    %257 = vmatprep.subr.mxu0 0.0
    %258 = vmatpush2.msra.mxu0 0.0
    %259 = vmatprep.subr.mxu0 0.0
    %260 = vmatpush2.msra.mxu0 0.0
    %261 = vmatprep.subr.mxu0 0.0
    %262 = vmatpush2.msra.mxu0 0.0
    %263 = vmatprep.subr.mxu0 0.0
    %264 = vmatpush2.msra.mxu0 0.0
    %265 = vmatprep.subr.mxu0 0.0
    %266 = vmatpush2.msra.mxu0 0.0
    %267 = vmatprep.subr.mxu0 0.0
    %268 = vmatpush2.msra.mxu0 0.0
    %269 = vmatprep.subr.mxu0 0.0
    %270 = vmatpush2.msra.mxu0 0.0
    %271 = vmatprep.subr.mxu0 0.0
    %272 = vmatpush2.msra.mxu0 0.0
    %273 = vmatprep.mubr.f32.mxu0 0.0
    %274 = vmatmul.mubr.f32.gmra.mxu0 %v207
    %v275 = vpop.f32.mrf.mxu0
    %v276 = vadd.f32 %v204, %v275
    %v277 = vpop.f32.mrf.mxu0
    %v278 = vadd.f32 %v204, %v277
    %279 = vdwg.mxu0
    %v280 = vmax.f32 %v276, 0.0
    %v281 = vmax.f32 %v278, 0.0
    %v284 = vrot.slane %v280, 4
    %v285 = vrot.slane %v281, 4
    %v288 = vsel %vm101, %v280, %v284
    %v289 = vsel %vm101, %v281, %v285
    %v290 = vmul.f32 %v102, %v288
    %v291 = vmul.f32 %v103, %v289
    %v292 = vmul.f32 %v104, %v288
    %v293 = vmul.f32 %v105, %v289
    %v294 = vld [vmem:[%s2 + $0x10] sm:$0xff]
    %v295 = vld [vmem:[%s6] sm:$0xff]
    %297 = vset.pattern.permute.xlu0 4
    %298 = vperm.xlu0 %297, %v295
    %v299 = vpop.permute.xlu0 %298
    %v302 = vsel %vm123, %v294, 0
    %304 = vmatprep.subr.mxu0 0.0
    %305 = vmatpush1.msra.mxu0 0.0
    %306 = vmatprep.subr.mxu0 0.0
    %307 = vmatpush1.msra.mxu0 0.0
    %308 = vmatprep.subr.mxu0 0.0
    %309 = vmatpush1.msra.mxu0 0.0
    %310 = vmatprep.subr.mxu0 0.0
    %311 = vmatpush1.msra.mxu0 0.0
    %312 = vmatprep.subr.mxu0 0.0
    %313 = vmatpush1.msra.mxu0 0.0
    %314 = vmatprep.subr.mxu0 0.0
    %315 = vmatpush1.msra.mxu0 0.0
    %316 = vmatprep.subr.mxu0 0.0
    %317 = vmatpush1.msra.mxu0 0.0
    %318 = vmatprep.subr.mxu0 0.0
    %319 = vmatpush1.msra.mxu0 0.0
    %320 = vmatprep.subr.mxu0 0.0
    %321 = vmatpush1.msra.mxu0 0.0
    %322 = vmatprep.subr.mxu0 0.0
    %323 = vmatpush1.msra.mxu0 0.0
    %324 = vmatprep.subr.mxu0 0.0
    %325 = vmatpush1.msra.mxu0 0.0
    %326 = vmatprep.subr.mxu0 0.0
    %327 = vmatpush1.msra.mxu0 0.0
    %328 = vmatprep.subr.mxu0 0.0
    %329 = vmatpush1.msra.mxu0 0.0
    %330 = vmatprep.subr.mxu0 0.0
    %331 = vmatpush1.msra.mxu0 0.0
    %332 = vmatprep.subr.mxu0 %v293
    %333 = vmatpush1.msra.mxu0 %v292
    %334 = vmatprep.subr.mxu0 %v291
    %335 = vmatpush1.msra.mxu0 %v290
    %336 = vmatprep.subr.mxu0 0.0
    %337 = vmatpush2.msra.mxu0 0.0
    %338 = vmatprep.subr.mxu0 0.0
    %339 = vmatpush2.msra.mxu0 0.0
    %340 = vmatprep.subr.mxu0 0.0
    %341 = vmatpush2.msra.mxu0 0.0
    %342 = vmatprep.subr.mxu0 0.0
    %343 = vmatpush2.msra.mxu0 0.0
    %344 = vmatprep.subr.mxu0 0.0
    %345 = vmatpush2.msra.mxu0 0.0
    %346 = vmatprep.subr.mxu0 0.0
    %347 = vmatpush2.msra.mxu0 0.0
    %348 = vmatprep.subr.mxu0 0.0
    %349 = vmatpush2.msra.mxu0 0.0
    %350 = vmatprep.subr.mxu0 0.0
    %351 = vmatpush2.msra.mxu0 0.0
    %352 = vmatprep.subr.mxu0 0.0
    %353 = vmatpush2.msra.mxu0 0.0
    %354 = vmatprep.subr.mxu0 0.0
    %355 = vmatpush2.msra.mxu0 0.0
    %356 = vmatprep.subr.mxu0 0.0
    %357 = vmatpush2.msra.mxu0 0.0
    %358 = vmatprep.subr.mxu0 0.0
    %359 = vmatpush2.msra.mxu0 0.0
    %360 = vmatprep.subr.mxu0 0.0
    %361 = vmatpush2.msra.mxu0 0.0
    %362 = vmatprep.subr.mxu0 0.0
    %363 = vmatpush2.msra.mxu0 0.0
    %364 = vmatprep.subr.mxu0 0.0
    %365 = vmatpush2.msra.mxu0 0.0
    %366 = vmatprep.subr.mxu0 0.0
    %367 = vmatpush2.msra.mxu0 0.0
    %368 = vmatprep.mubr.f32.mxu0 0.0
    %369 = vmatmul.mubr.f32.gmra.mxu0 %v302
    %v370 = vpop.f32.mrf.mxu0
    %v371 = vadd.f32 %v299, %v370
    %v372 = vpop.f32.mrf.mxu0
    %v373 = vadd.f32 %v299, %v372
    %374 = vdwg.mxu0
    %v375 = vmax.f32 %v371, 0.0
    %v376 = vmax.f32 %v373, 0.0
    %v377 = vld [vmem:[%s6 + $0x23] sm:$0x1]
    %vm378 = vcmask 64512
    %v380 = vsel %vm378, %v377, 0
    %382 = vmatprep.subr.mxu0 0.0
    %383 = vmatpush1.msra.mxu0 0.0
    %384 = vmatprep.subr.mxu0 0.0
    %385 = vmatpush1.msra.mxu0 0.0
    %386 = vmatprep.subr.mxu0 0.0
    %387 = vmatpush1.msra.mxu0 0.0
    %388 = vmatprep.subr.mxu0 0.0
    %389 = vmatpush1.msra.mxu0 0.0
    %390 = vmatprep.subr.mxu0 0.0
    %391 = vmatpush1.msra.mxu0 0.0
    %392 = vmatprep.subr.mxu0 0.0
    %393 = vmatpush1.msra.mxu0 0.0
    %394 = vmatprep.subr.mxu0 0.0
    %395 = vmatpush1.msra.mxu0 0.0
    %396 = vmatprep.subr.mxu0 0.0
    %397 = vmatpush1.msra.mxu0 0.0
    %398 = vmatprep.subr.mxu0 0.0
    %399 = vmatpush1.msra.mxu0 0.0
    %400 = vmatprep.subr.mxu0 0.0
    %401 = vmatpush1.msra.mxu0 0.0
    %402 = vmatprep.subr.mxu0 0.0
    %403 = vmatpush1.msra.mxu0 0.0
    %404 = vmatprep.subr.mxu0 0.0
    %405 = vmatpush1.msra.mxu0 0.0
    %406 = vmatprep.subr.mxu0 0.0
    %407 = vmatpush1.msra.mxu0 0.0
    %408 = vmatprep.subr.mxu0 0.0
    %409 = vmatpush1.msra.mxu0 0.0
    %410 = vmatprep.subr.mxu0 0.0
    %411 = vmatpush1.msra.mxu0 0.0
    %412 = vmatprep.subr.mxu0 %v376
    %413 = vmatpush1.msra.mxu0 %v375
    %414 = vmatprep.subr.mxu0 0.0
    %415 = vmatpush2.msra.mxu0 0.0
    %416 = vmatprep.subr.mxu0 0.0
    %417 = vmatpush2.msra.mxu0 0.0
    %418 = vmatprep.subr.mxu0 0.0
    %419 = vmatpush2.msra.mxu0 0.0
    %420 = vmatprep.subr.mxu0 0.0
    %421 = vmatpush2.msra.mxu0 0.0
    %422 = vmatprep.subr.mxu0 0.0
    %423 = vmatpush2.msra.mxu0 0.0
    %424 = vmatprep.subr.mxu0 0.0
    %425 = vmatpush2.msra.mxu0 0.0
    %426 = vmatprep.subr.mxu0 0.0
    %427 = vmatpush2.msra.mxu0 0.0
    %428 = vmatprep.subr.mxu0 0.0
    %429 = vmatpush2.msra.mxu0 0.0
    %430 = vmatprep.subr.mxu0 0.0
    %431 = vmatpush2.msra.mxu0 0.0
    %432 = vmatprep.subr.mxu0 0.0
    %433 = vmatpush2.msra.mxu0 0.0
    %434 = vmatprep.subr.mxu0 0.0
    %435 = vmatpush2.msra.mxu0 0.0
    %436 = vmatprep.subr.mxu0 0.0
    %437 = vmatpush2.msra.mxu0 0.0
    %438 = vmatprep.subr.mxu0 0.0
    %439 = vmatpush2.msra.mxu0 0.0
    %440 = vmatprep.subr.mxu0 0.0
    %441 = vmatpush2.msra.mxu0 0.0
    %442 = vmatprep.subr.mxu0 0.0
    %443 = vmatpush2.msra.mxu0 0.0
    %444 = vmatprep.subr.mxu0 0.0
    %445 = vmatpush2.msra.mxu0 0.0
    %446 = vmatprep.mubr.f32.mxu0 0.0
    %447 = vmatmul.mubr.f32.gmra.mxu0 %v380
    %v448 = vpop.f32.mrf.mxu0
    %v449 = vadd.f32 0.0, %v448
    %v450 = vpop.f32.mrf.mxu0
    %v451 = vadd.f32 0.0, %v450
    %452 = vdwg.mxu0
    %vm453 = vcmask 31744
    %v455 = vsel %vm453, %v200, 0
    %v458 = vsel %vm101, %v198, 0
    %v461 = vsel %vm101, %v199, 0
    %463 = vmatprep.subr.mxu0 0.0
    %464 = vmatpush1.msra.mxu0 0.0
    %465 = vmatprep.subr.mxu0 0.0
    %466 = vmatpush1.msra.mxu0 0.0
    %467 = vmatprep.subr.mxu0 0.0
    %468 = vmatpush1.msra.mxu0 0.0
    %469 = vmatprep.subr.mxu0 0.0
    %470 = vmatpush1.msra.mxu0 0.0
    %471 = vmatprep.subr.mxu0 0.0
    %472 = vmatpush1.msra.mxu0 0.0
    %473 = vmatprep.subr.mxu0 0.0
    %474 = vmatpush1.msra.mxu0 0.0
    %475 = vmatprep.subr.mxu0 0.0
    %476 = vmatpush1.msra.mxu0 0.0
    %477 = vmatprep.subr.mxu0 0.0
    %478 = vmatpush1.msra.mxu0 0.0
    %479 = vmatprep.subr.mxu0 0.0
    %480 = vmatpush1.msra.mxu0 0.0
    %481 = vmatprep.subr.mxu0 0.0
    %482 = vmatpush1.msra.mxu0 0.0
    %483 = vmatprep.subr.mxu0 0.0
    %484 = vmatpush1.msra.mxu0 0.0
    %485 = vmatprep.subr.mxu0 0.0
    %486 = vmatpush1.msra.mxu0 0.0
    %487 = vmatprep.subr.mxu0 0.0
    %488 = vmatpush1.msra.mxu0 0.0
    %489 = vmatprep.subr.mxu0 0.0
    %490 = vmatpush1.msra.mxu0 0.0
    %491 = vmatprep.subr.mxu0 0.0
    %492 = vmatpush1.msra.mxu0 0.0
    %493 = vmatprep.subr.mxu0 %v461
    %494 = vmatpush1.msra.mxu0 %v458
    %495 = vmatprep.subr.mxu0 0.0
    %496 = vmatpush2.msra.mxu0 0.0
    %497 = vmatprep.subr.mxu0 0.0
    %498 = vmatpush2.msra.mxu0 0.0
    %499 = vmatprep.subr.mxu0 0.0
    %500 = vmatpush2.msra.mxu0 0.0
    %501 = vmatprep.subr.mxu0 0.0
    %502 = vmatpush2.msra.mxu0 0.0
    %503 = vmatprep.subr.mxu0 0.0
    %504 = vmatpush2.msra.mxu0 0.0
    %505 = vmatprep.subr.mxu0 0.0
    %506 = vmatpush2.msra.mxu0 0.0
    %507 = vmatprep.subr.mxu0 0.0
    %508 = vmatpush2.msra.mxu0 0.0
    %509 = vmatprep.subr.mxu0 0.0
    %510 = vmatpush2.msra.mxu0 0.0
    %511 = vmatprep.subr.mxu0 0.0
    %512 = vmatpush2.msra.mxu0 0.0
    %513 = vmatprep.subr.mxu0 0.0
    %514 = vmatpush2.msra.mxu0 0.0
    %515 = vmatprep.subr.mxu0 0.0
    %516 = vmatpush2.msra.mxu0 0.0
    %517 = vmatprep.subr.mxu0 0.0
    %518 = vmatpush2.msra.mxu0 0.0
    %519 = vmatprep.subr.mxu0 0.0
    %520 = vmatpush2.msra.mxu0 0.0
    %521 = vmatprep.subr.mxu0 0.0
    %522 = vmatpush2.msra.mxu0 0.0
    %523 = vmatprep.subr.mxu0 0.0
    %524 = vmatpush2.msra.mxu0 0.0
    %525 = vmatprep.subr.mxu0 0.0
    %526 = vmatpush2.msra.mxu0 0.0
    %527 = vmatprep.mubr.f32.mxu0 0.0
    %528 = vmatmul.mubr.f32.gmra.mxu0 %v455
    %v529 = vpop.f32.mrf.mxu0
    %v530 = vadd.f32 %v449, %v529
    %v531 = vpop.f32.mrf.mxu0
    %v532 = vadd.f32 %v451, %v531
    %533 = vdwg.mxu0
    %v534 = vld [vmem:[%s5] sm:$0xff]
    %v535 = vld [vmem:[%s5 + $0x8] sm:$0xff]
    %v536 = vld [vmem:[%s5 + $0x10] sm:$0xff]
    %v537 = vld [vmem:[%s5 + $0x18] sm:$0xff]
    %v538 = vld [vmem:[%s5 + $0x20] sm:$0xff]
    %v539 = vld [vmem:[%s5 + $0x28] sm:$0xff]
    %v540 = vld [vmem:[%s5 + $0x30] sm:$0xff]
    %v541 = vld [vmem:[%s5 + $0x38] sm:$0xff]
    %v542 = vld [vmem:[%s5 + $0x40] sm:$0xff]
    %v543 = vld [vmem:[%s5 + $0x48] sm:$0xff]
    %v544 = vld [vmem:[%s5 + $0x50] sm:$0xff]
    %v545 = vld [vmem:[%s5 + $0x58] sm:$0xff]
    %v546 = vld [vmem:[%s5 + $0x60] sm:$0xff]
    %v547 = vld [vmem:[%s5 + $0x68] sm:$0xff]
    %v548 = vld [vmem:[%s5 + $0x70] sm:$0xff]
    %v549 = vld [vmem:[%s5 + $0x78] sm:$0xff]
    %v550 = vld [vmem:[%s5 + $0x80] sm:$0xff]
    %v551 = vld [vmem:[%s5 + $0x88] sm:$0xff]
    %v552 = vld [vmem:[%s5 + $0x90] sm:$0xff]
    %v553 = vld [vmem:[%s5 + $0x98] sm:$0xff]
    %v554 = vld [vmem:[%s5 + $0xa0] sm:$0xff]
    %v555 = vld [vmem:[%s5 + $0xa8] sm:$0xff]
    %v556 = vld [vmem:[%s5 + $0xb0] sm:$0xff]
    %v557 = vld [vmem:[%s5 + $0xb8] sm:$0xff]
    %v558 = vld [vmem:[%s5 + $0xc0] sm:$0xff]
    %v559 = vld [vmem:[%s5 + $0xc8] sm:$0xff]
    %v560 = vld [vmem:[%s5 + $0xd0] sm:$0xff]
    %v561 = vld [vmem:[%s5 + $0xd8] sm:$0xff]
    %v562 = vld [vmem:[%s5 + $0xe0] sm:$0xff]
    %v563 = vld [vmem:[%s5 + $0xe8] sm:$0xff]
    %v564 = vld [vmem:[%s5 + $0xf0] sm:$0xff]
    %v565 = vld [vmem:[%s5 + $0xf8] sm:$0xff]
    %566 = vmatprep.subr.mxu0 0.0
    %567 = vmatpush1.msra.mxu0 %v549
    %568 = vmatprep.subr.mxu0 0.0
    %569 = vmatpush1.msra.mxu0 %v548
    %570 = vmatprep.subr.mxu0 0.0
    %571 = vmatpush1.msra.mxu0 %v547
    %572 = vmatprep.subr.mxu0 0.0
    %573 = vmatpush1.msra.mxu0 %v546
    %574 = vmatprep.subr.mxu0 0.0
    %575 = vmatpush1.msra.mxu0 %v545
    %576 = vmatprep.subr.mxu0 0.0
    %577 = vmatpush1.msra.mxu0 %v544
    %578 = vmatprep.subr.mxu0 0.0
    %579 = vmatpush1.msra.mxu0 %v543
    %580 = vmatprep.subr.mxu0 0.0
    %581 = vmatpush1.msra.mxu0 %v542
    %582 = vmatprep.subr.mxu0 0.0
    %583 = vmatpush1.msra.mxu0 %v541
    %584 = vmatprep.subr.mxu0 0.0
    %585 = vmatpush1.msra.mxu0 %v540
    %586 = vmatprep.subr.mxu0 0.0
    %587 = vmatpush1.msra.mxu0 %v539
    %588 = vmatprep.subr.mxu0 0.0
    %589 = vmatpush1.msra.mxu0 %v538
    %590 = vmatprep.subr.mxu0 0.0
    %591 = vmatpush1.msra.mxu0 %v537
    %592 = vmatprep.subr.mxu0 0.0
    %593 = vmatpush1.msra.mxu0 %v536
    %594 = vmatprep.subr.mxu0 0.0
    %595 = vmatpush1.msra.mxu0 %v535
    %596 = vmatprep.subr.mxu0 0.0
    %597 = vmatpush1.msra.mxu0 %v534
    %598 = vmatprep.subr.mxu0 0.0
    %599 = vmatpush2.msra.mxu0 %v565
    %600 = vmatprep.subr.mxu0 0.0
    %601 = vmatpush2.msra.mxu0 %v564
    %602 = vmatprep.subr.mxu0 0.0
    %603 = vmatpush2.msra.mxu0 %v563
    %604 = vmatprep.subr.mxu0 0.0
    %605 = vmatpush2.msra.mxu0 %v562
    %606 = vmatprep.subr.mxu0 0.0
    %607 = vmatpush2.msra.mxu0 %v561
    %608 = vmatprep.subr.mxu0 0.0
    %609 = vmatpush2.msra.mxu0 %v560
    %610 = vmatprep.subr.mxu0 0.0
    %611 = vmatpush2.msra.mxu0 %v559
    %612 = vmatprep.subr.mxu0 0.0
    %613 = vmatpush2.msra.mxu0 %v558
    %614 = vmatprep.subr.mxu0 0.0
    %615 = vmatpush2.msra.mxu0 %v557
    %616 = vmatprep.subr.mxu0 0.0
    %617 = vmatpush2.msra.mxu0 %v556
    %618 = vmatprep.subr.mxu0 0.0
    %619 = vmatpush2.msra.mxu0 %v555
    %620 = vmatprep.subr.mxu0 0.0
    %621 = vmatpush2.msra.mxu0 %v554
    %622 = vmatprep.subr.mxu0 0.0
    %623 = vmatpush2.msra.mxu0 %v553
    %624 = vmatprep.subr.mxu0 0.0
    %625 = vmatpush2.msra.mxu0 %v552
    %626 = vmatprep.subr.mxu0 0.0
    %627 = vmatpush2.msra.mxu0 %v551
    %628 = vmatprep.subr.mxu0 0.0
    %629 = vmatpush2.msra.mxu0 %v550
    %630 = vmatprep.mubr.f32.mxu0 %v532
    %631 = vmatmul.mubr.f32.gmra.mxu0 %v530
    %v632 = vpop.f32.mrf.mxu0
    %v633 = vadd.f32 0.0, %v632
    %v634 = vpop.f32.mrf.mxu0
    %635 = vdwg.mxu0
    %v636 = vld [vmem:[%s6] sm:$0xff]
    %v637 = vld [vmem:[%s6 + $0x8] sm:$0xff]
    %v638 = vld [vmem:[%s6 + $0x10] sm:$0xff]
    %v639 = vld [vmem:[%s6 + $0x18] sm:$0xff]
    %v640 = vld [vmem:[%s3] sm:$0xff]
    %v641 = vld [vmem:[%s3 + $0x8] sm:$0xff]
    %v642 = vld [vmem:[%s3 + $0x10] sm:$0xff]
    %v643 = vld [vmem:[%s3 + $0x18] sm:$0xff]
    %v644 = vld [vmem:[%s1] sm:$0xff]
    %v645 = vld [vmem:[%s1 + $0x8] sm:$0xff]
    %v646 = vld [vmem:[%s1 + $0x10] sm:$0xff]
    %v647 = vld [vmem:[%s1 + $0x18] sm:$0xff]
    %v648 = vld [vmem:[%s1 + $0x20] sm:$0xff]
    %v649 = vld [vmem:[%s1 + $0x28] sm:$0xff]
    %v650 = vld [vmem:[%s1 + $0x30] sm:$0xff]
    %v651 = vld [vmem:[%s1 + $0x38] sm:$0xff]
    %653 = vset.pattern.permute.xlu0 0
    %654 = vperm.xlu0 %653, %v636
    %v655 = vpop.permute.xlu0 %654
    %658 = vset.pattern.permute.xlu0 0
    %659 = vperm.xlu0 %658, %v637
    %v660 = vpop.permute.xlu0 %659
    %663 = vset.pattern.permute.xlu0 0
    %664 = vperm.xlu0 %663, %v638
    %v665 = vpop.permute.xlu0 %664
    %668 = vset.pattern.permute.xlu0 0
    %669 = vperm.xlu0 %668, %v639
    %v670 = vpop.permute.xlu0 %669
    %vm672 = vcmask 523264
    %v674 = vsel %vm672, %v640, 0
    %v677 = vsel %vm672, %v641, 0
    %v680 = vsel %vm672, %v642, 0
    %v683 = vsel %vm672, %v643, 0
    %685 = vmatprep.subr.mxu0 0.0
    %686 = vmatpush1.msra.mxu0 0.0
    %687 = vmatprep.subr.mxu0 0.0
    %688 = vmatpush1.msra.mxu0 0.0
    %689 = vmatprep.subr.mxu0 0.0
    %690 = vmatpush1.msra.mxu0 0.0
    %691 = vmatprep.subr.mxu0 0.0
    %692 = vmatpush1.msra.mxu0 0.0
    %693 = vmatprep.subr.mxu0 0.0
    %694 = vmatpush1.msra.mxu0 0.0
    %695 = vmatprep.subr.mxu0 0.0
    %696 = vmatpush1.msra.mxu0 0.0
    %697 = vmatprep.subr.mxu0 0.0
    %698 = vmatpush1.msra.mxu0 0.0
    %699 = vmatprep.subr.mxu0 0.0
    %700 = vmatpush1.msra.mxu0 0.0
    %701 = vmatprep.subr.mxu0 0.0
    %702 = vmatpush1.msra.mxu0 %v651
    %703 = vmatprep.subr.mxu0 0.0
    %704 = vmatpush1.msra.mxu0 %v650
    %705 = vmatprep.subr.mxu0 0.0
    %706 = vmatpush1.msra.mxu0 %v649
    %707 = vmatprep.subr.mxu0 0.0
    %708 = vmatpush1.msra.mxu0 %v648
    %709 = vmatprep.subr.mxu0 0.0
    %710 = vmatpush1.msra.mxu0 %v647
    %711 = vmatprep.subr.mxu0 0.0
    %712 = vmatpush1.msra.mxu0 %v646
    %713 = vmatprep.subr.mxu0 0.0
    %714 = vmatpush1.msra.mxu0 %v645
    %715 = vmatprep.subr.mxu0 0.0
    %716 = vmatpush1.msra.mxu0 %v644
    %717 = vmatprep.subr.mxu0 0.0
    %718 = vmatpush2.msra.mxu0 0.0
    %719 = vmatprep.subr.mxu0 0.0
    %720 = vmatpush2.msra.mxu0 0.0
    %721 = vmatprep.subr.mxu0 0.0
    %722 = vmatpush2.msra.mxu0 0.0
    %723 = vmatprep.subr.mxu0 0.0
    %724 = vmatpush2.msra.mxu0 0.0
    %725 = vmatprep.subr.mxu0 0.0
    %726 = vmatpush2.msra.mxu0 0.0
    %727 = vmatprep.subr.mxu0 0.0
    %728 = vmatpush2.msra.mxu0 0.0
    %729 = vmatprep.subr.mxu0 0.0
    %730 = vmatpush2.msra.mxu0 0.0
    %731 = vmatprep.subr.mxu0 0.0
    %732 = vmatpush2.msra.mxu0 0.0
    %733 = vmatprep.subr.mxu0 0.0
    %734 = vmatpush2.msra.mxu0 0.0
    %735 = vmatprep.subr.mxu0 0.0
    %736 = vmatpush2.msra.mxu0 0.0
    %737 = vmatprep.subr.mxu0 0.0
    %738 = vmatpush2.msra.mxu0 0.0
    %739 = vmatprep.subr.mxu0 0.0
    %740 = vmatpush2.msra.mxu0 0.0
    %741 = vmatprep.subr.mxu0 0.0
    %742 = vmatpush2.msra.mxu0 0.0
    %743 = vmatprep.subr.mxu0 0.0
    %744 = vmatpush2.msra.mxu0 0.0
    %745 = vmatprep.subr.mxu0 0.0
    %746 = vmatpush2.msra.mxu0 0.0
    %747 = vmatprep.subr.mxu0 0.0
    %748 = vmatpush2.msra.mxu0 0.0
    %749 = vmatprep.mubr.f32.mxu0 0.0
    %750 = vmatmul.mubr.f32.gmra.mxu0 %v674
    %v751 = vpop.f32.mrf.mxu0
    %v752 = vadd.f32 %v655, %v751
    %v753 = vpop.f32.mrf.mxu0
    %754 = vmatprep.mubr.f32.mxu0 0.0
    %755 = vmatmul.mubr.f32.gmra.mxu0 %v677
    %v756 = vpop.f32.mrf.mxu0
    %v757 = vadd.f32 %v660, %v756
    %v758 = vpop.f32.mrf.mxu0
    %759 = vmatprep.mubr.f32.mxu0 0.0
    %760 = vmatmul.mubr.f32.gmra.mxu0 %v680
    %v761 = vpop.f32.mrf.mxu0
    %v762 = vadd.f32 %v665, %v761
    %v763 = vpop.f32.mrf.mxu0
    %764 = vmatprep.mubr.f32.mxu0 0.0
    %765 = vmatmul.mubr.f32.gmra.mxu0 %v683
    %v766 = vpop.f32.mrf.mxu0
    %v767 = vadd.f32 %v670, %v766
    %v768 = vpop.f32.mrf.mxu0
    %769 = vdwg.mxu0
    %v770 = vmax.f32 %v752, 0.0
    %v771 = vmax.f32 %v757, 0.0
    %v772 = vmax.f32 %v762, 0.0
    %v773 = vmax.f32 %v767, 0.0
    %v774 = vld [vmem:[%s4] sm:$0xff]
    %v775 = vld [vmem:[%s4 + $0x8] sm:$0xff]
    %776 = vset.pattern.permute.xlu0 1
    %777 = vperm.xlu0 %776, %v636
    %v778 = vpop.permute.xlu0 %777
    %780 = vset.pattern.permute.xlu0 1
    %781 = vperm.xlu0 %780, %v637
    %v782 = vpop.permute.xlu0 %781
    %vm784 = vcmask 261120
    %v786 = vsel %vm784, %v774, 0
    %v789 = vsel %vm784, %v775, 0
    %791 = vmatprep.subr.mxu0 0.0
    %792 = vmatpush1.msra.mxu0 0.0
    %793 = vmatprep.subr.mxu0 0.0
    %794 = vmatpush1.msra.mxu0 0.0
    %795 = vmatprep.subr.mxu0 0.0
    %796 = vmatpush1.msra.mxu0 0.0
    %797 = vmatprep.subr.mxu0 0.0
    %798 = vmatpush1.msra.mxu0 0.0
    %799 = vmatprep.subr.mxu0 0.0
    %800 = vmatpush1.msra.mxu0 0.0
    %801 = vmatprep.subr.mxu0 0.0
    %802 = vmatpush1.msra.mxu0 0.0
    %803 = vmatprep.subr.mxu0 0.0
    %804 = vmatpush1.msra.mxu0 0.0
    %805 = vmatprep.subr.mxu0 0.0
    %806 = vmatpush1.msra.mxu0 0.0
    %807 = vmatprep.subr.mxu0 0.0
    %808 = vmatpush1.msra.mxu0 0.0
    %809 = vmatprep.subr.mxu0 0.0
    %810 = vmatpush1.msra.mxu0 0.0
    %811 = vmatprep.subr.mxu0 0.0
    %812 = vmatpush1.msra.mxu0 0.0
    %813 = vmatprep.subr.mxu0 0.0
    %814 = vmatpush1.msra.mxu0 0.0
    %815 = vmatprep.subr.mxu0 0.0
    %816 = vmatpush1.msra.mxu0 %v773
    %817 = vmatprep.subr.mxu0 0.0
    %818 = vmatpush1.msra.mxu0 %v772
    %819 = vmatprep.subr.mxu0 0.0
    %820 = vmatpush1.msra.mxu0 %v771
    %821 = vmatprep.subr.mxu0 0.0
    %822 = vmatpush1.msra.mxu0 %v770
    %823 = vmatprep.subr.mxu0 0.0
    %824 = vmatpush2.msra.mxu0 0.0
    %825 = vmatprep.subr.mxu0 0.0
    %826 = vmatpush2.msra.mxu0 0.0
    %827 = vmatprep.subr.mxu0 0.0
    %828 = vmatpush2.msra.mxu0 0.0
    %829 = vmatprep.subr.mxu0 0.0
    %830 = vmatpush2.msra.mxu0 0.0
    %831 = vmatprep.subr.mxu0 0.0
    %832 = vmatpush2.msra.mxu0 0.0
    %833 = vmatprep.subr.mxu0 0.0
    %834 = vmatpush2.msra.mxu0 0.0
    %835 = vmatprep.subr.mxu0 0.0
    %836 = vmatpush2.msra.mxu0 0.0
    %837 = vmatprep.subr.mxu0 0.0
    %838 = vmatpush2.msra.mxu0 0.0
    %839 = vmatprep.subr.mxu0 0.0
    %840 = vmatpush2.msra.mxu0 0.0
    %841 = vmatprep.subr.mxu0 0.0
    %842 = vmatpush2.msra.mxu0 0.0
    %843 = vmatprep.subr.mxu0 0.0
    %844 = vmatpush2.msra.mxu0 0.0
    %845 = vmatprep.subr.mxu0 0.0
    %846 = vmatpush2.msra.mxu0 0.0
    %847 = vmatprep.subr.mxu0 0.0
    %848 = vmatpush2.msra.mxu0 0.0
    %849 = vmatprep.subr.mxu0 0.0
    %850 = vmatpush2.msra.mxu0 0.0
    %851 = vmatprep.subr.mxu0 0.0
    %852 = vmatpush2.msra.mxu0 0.0
    %853 = vmatprep.subr.mxu0 0.0
    %854 = vmatpush2.msra.mxu0 0.0
    %855 = vmatprep.mubr.f32.mxu0 0.0
    %856 = vmatmul.mubr.f32.gmra.mxu0 %v786
    %v857 = vpop.f32.mrf.mxu0
    %v858 = vadd.f32 %v778, %v857
    %v859 = vpop.f32.mrf.mxu0
    %860 = vmatprep.mubr.f32.mxu0 0.0
    %861 = vmatmul.mubr.f32.gmra.mxu0 %v789
    %v862 = vpop.f32.mrf.mxu0
    %v863 = vadd.f32 %v782, %v862
    %v864 = vpop.f32.mrf.mxu0
    %865 = vdwg.mxu0
    %v866 = vmax.f32 %v858, 0.0
    %v867 = vmax.f32 %v863, 0.0
    %v868 = vld [vmem:[%s6 + $0x21] sm:$0x1]
    %v869 = vld [vmem:[%s6 + $0x20] sm:$0x1]
    %v870 = vadd.f32 %v869, %v633
    %v872 = vsel %vm123, %v868, 0
    %874 = vmatprep.subr.mxu0 0.0
    %875 = vmatpush1.msra.mxu0 0.0
    %876 = vmatprep.subr.mxu0 0.0
    %877 = vmatpush1.msra.mxu0 0.0
    %878 = vmatprep.subr.mxu0 0.0
    %879 = vmatpush1.msra.mxu0 0.0
    %880 = vmatprep.subr.mxu0 0.0
    %881 = vmatpush1.msra.mxu0 0.0
    %882 = vmatprep.subr.mxu0 0.0
    %883 = vmatpush1.msra.mxu0 0.0
    %884 = vmatprep.subr.mxu0 0.0
    %885 = vmatpush1.msra.mxu0 0.0
    %886 = vmatprep.subr.mxu0 0.0
    %887 = vmatpush1.msra.mxu0 0.0
    %888 = vmatprep.subr.mxu0 0.0
    %889 = vmatpush1.msra.mxu0 0.0
    %890 = vmatprep.subr.mxu0 0.0
    %891 = vmatpush1.msra.mxu0 0.0
    %892 = vmatprep.subr.mxu0 0.0
    %893 = vmatpush1.msra.mxu0 0.0
    %894 = vmatprep.subr.mxu0 0.0
    %895 = vmatpush1.msra.mxu0 0.0
    %896 = vmatprep.subr.mxu0 0.0
    %897 = vmatpush1.msra.mxu0 0.0
    %898 = vmatprep.subr.mxu0 0.0
    %899 = vmatpush1.msra.mxu0 0.0
    %900 = vmatprep.subr.mxu0 0.0
    %901 = vmatpush1.msra.mxu0 0.0
    %902 = vmatprep.subr.mxu0 0.0
    %903 = vmatpush1.msra.mxu0 %v867
    %904 = vmatprep.subr.mxu0 0.0
    %905 = vmatpush1.msra.mxu0 %v866
    %906 = vmatprep.subr.mxu0 0.0
    %907 = vmatpush2.msra.mxu0 0.0
    %908 = vmatprep.subr.mxu0 0.0
    %909 = vmatpush2.msra.mxu0 0.0
    %910 = vmatprep.subr.mxu0 0.0
    %911 = vmatpush2.msra.mxu0 0.0
    %912 = vmatprep.subr.mxu0 0.0
    %913 = vmatpush2.msra.mxu0 0.0
    %914 = vmatprep.subr.mxu0 0.0
    %915 = vmatpush2.msra.mxu0 0.0
    %916 = vmatprep.subr.mxu0 0.0
    %917 = vmatpush2.msra.mxu0 0.0
    %918 = vmatprep.subr.mxu0 0.0
    %919 = vmatpush2.msra.mxu0 0.0
    %920 = vmatprep.subr.mxu0 0.0
    %921 = vmatpush2.msra.mxu0 0.0
    %922 = vmatprep.subr.mxu0 0.0
    %923 = vmatpush2.msra.mxu0 0.0
    %924 = vmatprep.subr.mxu0 0.0
    %925 = vmatpush2.msra.mxu0 0.0
    %926 = vmatprep.subr.mxu0 0.0
    %927 = vmatpush2.msra.mxu0 0.0
    %928 = vmatprep.subr.mxu0 0.0
    %929 = vmatpush2.msra.mxu0 0.0
    %930 = vmatprep.subr.mxu0 0.0
    %931 = vmatpush2.msra.mxu0 0.0
    %932 = vmatprep.subr.mxu0 0.0
    %933 = vmatpush2.msra.mxu0 0.0
    %934 = vmatprep.subr.mxu0 0.0
    %935 = vmatpush2.msra.mxu0 0.0
    %936 = vmatprep.subr.mxu0 0.0
    %937 = vmatpush2.msra.mxu0 0.0
    %938 = vmatprep.mubr.f32.mxu0 0.0
    %939 = vmatmul.mubr.f32.gmra.mxu0 %v872
    %v940 = vpop.f32.mrf.mxu0
    %v941 = vadd.f32 0.0, %v940
    %v942 = vpop.f32.mrf.mxu0
    %943 = vdwg.mxu0
    %v944 = vadd.f32 %v870, %v941
    %v945 = vxor.u32 %v944, 2147483648
    %v946 = vmul.f32 %v945, 1.442695
    %v947 = vpow.pop %v946
    %v948 = vadd.f32 %v947, 1.0
    %v949 = vrcp.pop %v948
    %v950 = vmul.f32 1.0, %v949
    %vm951 = vcmask 122880
    %952 = vst.msk [vmem:[#allocation2] sm:$0x1] %vm951, %v950
    // Predicated region
    $region30: #{xdeepfm_pallas.1} parent=1 // pred_check
      _
    $region31: #{xdeepfm_pallas.1} parent=1 // pred_check_branch
      %954 = sbr.rel (0) target = $region33
    $region32: #{xdeepfm_pallas.1} parent=1 // pred_region
      %s956 = ssub.s32 16, 16
      %957 = vsyncadd [#allocation3], %s956
      %s959 = sshll.u32 [#allocation2], 4
      %s960 = int_to_ptr.vmem [resolvable:$true] %s959
      %962 = dma.vmem_to_hbm [thread:$0]  %s960, 16, %s7, [#allocation3]
    $region33: #{xdeepfm_pallas.1} parent=1 // pred_fallthru
      _
    // Predicated region
    $region34: #{xdeepfm_pallas.1} parent=1 // pred_check
      _
    $region35: #{xdeepfm_pallas.1} parent=1 // pred_check_branch
      %964 = sbr.rel (0) target = $region37
    $region36: #{xdeepfm_pallas.1} parent=1 // pred_region
      %965 = dma.done [#allocation3], 16
    $region37: #{xdeepfm_pallas.1} parent=1 // pred_fallthru
      _
    %966 = vsyncpa [#allocation3], 1

</llo_original>
